<compile_context>
chip_gen: v5e
topology: v5e:2x2
jax: 0.10.0
libtpu: 0.0.40
codegen_flags: <defaults>
</compile_context>

<pallas_src>
import math
from functools import partial

import numpy as np
import jax
import jax.numpy as jnp
from jax.experimental import pallas as pl
from jax.experimental.pallas import tpu as pltpu


# ---------------------------------------------------------------------------
# Pallas kernel: 3x3 "same" conv (stride 1, pad 1, groups=1) as one matmul.
#   x_ref: (1, Cin, H*W)   one image; channels in sublanes, pixels in lanes
#   w_ref: (Cout, 9*Cin)   weights with the 9 taps folded into the K dim
#   b_ref: (Cout, 1)       bias (broadcast over lanes)
#   m_ref: (9*Cin, H*W)    0/1 masks implementing the zero-padding halo
#   o_ref: (1, Cout, H*W)  lane-dense output (full-width vst)
# ---------------------------------------------------------------------------
def _conv3x3_kernel(x_ref, w_ref, b_ref, m_ref, o_ref, *, W):
    x = x_ref[0]                                    # (Cin, HW)

    # Build the im2col patch matrix once.  For tap (dh, dw) the needed pixel is
    # a static shift of the flattened image; wrap-around values land only in
    # positions zeroed by the masks (== zero padding of the conv).
    shifted = []
    for dh in (-1, 0, 1):
        for dw in (-1, 0, 1):
            s = dh * W + dw                         # flat shift for this tap
            shifted.append(x if s == 0 else jnp.roll(x, -s, axis=1))
    patches = jnp.concatenate(shifted, axis=0) * m_ref[...]      # (9*Cin, HW)

    # Single fused MXU matmul (K = 9*Cin), f32 accumulation, bias added once.
    acc = jnp.dot(w_ref[...], patches, preferred_element_type=jnp.float32)
    o_ref[0] = (acc + b_ref[...]).astype(o_ref.dtype)


def _tap_masks(H, W, Cin):
    """(9*Cin, H*W) 0/1 masks that zero out-of-bounds taps (zero padding)."""
    i = np.arange(H * W) // W
    j = np.arange(H * W) % W
    rows = []
    for dh in (-1, 0, 1):
        for dw in (-1, 0, 1):
            valid = ((i + dh >= 0) & (i + dh < H) &
                     (j + dw >= 0) & (j + dw < W)).astype(np.float32)
            rows.append(np.broadcast_to(valid, (Cin, H * W)))
    return np.concatenate(rows, axis=0)


def conv3x3_same_nchw(x_nchw, w_oihw, b):
    """3x3, stride 1, pad 1 conv in NCHW via the lane-dense Pallas kernel."""
    N, Cin, H, W = x_nchw.shape
    Cout = w_oihw.shape[0]
    HW = H * W

    # (Cout, Cin, 3, 3) -> (Cout, 9*Cin): tap-major / channel-minor, matching
    # the patch-row ordering built inside the kernel.
    w2d = jnp.transpose(w_oihw, (0, 2, 3, 1)).reshape(Cout, 9 * Cin)
    masks = jnp.asarray(_tap_masks(H, W, Cin), dtype=x_nchw.dtype)
    x_flat = x_nchw.reshape(N, Cin, HW)             # contiguous: metadata only

    y_flat = pl.pallas_call(
        partial(_conv3x3_kernel, W=W),
        out_shape=jax.ShapeDtypeStruct((N, Cout, HW), x_nchw.dtype),
        grid=(N,),
        in_specs=[
            pl.BlockSpec((1, Cin, HW), lambda n: (n, 0, 0)),
            pl.BlockSpec((Cout, 9 * Cin), lambda n: (0, 0)),
            pl.BlockSpec((Cout, 1), lambda n: (0, 0)),
            pl.BlockSpec((9 * Cin, HW), lambda n: (0, 0)),
        ],
        out_specs=pl.BlockSpec((1, Cout, HW), lambda n: (n, 0, 0)),
        compiler_params=pltpu.CompilerParams(
            dimension_semantics=("parallel",)),     # batch shards across TCs
    )(x_flat, w2d, b.reshape(Cout, 1), masks)
    return y_flat.reshape(N, Cout, H, W)


# ---------------------------------------------------------------------------
# PixelShuffle (NCHW semantics, exactly like torch.nn.PixelShuffle) — glue.
# ---------------------------------------------------------------------------
def pixel_shuffle_nchw(x, r):
    N, Cr2, H, W = x.shape
    C = Cr2 // (r * r)
    x = x.reshape(N, C, r, r, H, W)
    x = x.transpose(0, 1, 4, 2, 5, 3)
    return x.reshape(N, C, H * r, W * r)


# ---------------------------------------------------------------------------
# _UpsampleBlock forward: [Conv2d(C -> r^2*C, 3, 1, 1), PixelShuffle(r)] * k
# ---------------------------------------------------------------------------
def init_upsample_params(n_channels, scale, key):
    """Deterministic parameter init (PyTorch default-style uniform bounds)."""
    params = []
    if scale in (2, 4, 8):
        stages = [(2, 4 * n_channels)] * int(math.log(scale, 2))
    elif scale == 3:
        stages = [(3, 9 * n_channels)]
    else:
        raise ValueError("scale must be 2, 3, 4 or 8")
    for r, cout in stages:
        key, k_w, k_b = jax.random.split(key, 3)
        fan_in = n_channels * 3 * 3
        bound = 1.0 / math.sqrt(fan_in)
        w_oihw = jax.random.uniform(k_w, (cout, n_channels, 3, 3),
                                    jnp.float32, -bound, bound)
        b = jax.random.uniform(k_b, (cout,), jnp.float32, -bound, bound)
        params.append((w_oihw, b, r))
    return params


def upsample_block_forward(x_nchw, params):
    out = x_nchw
    for w_oihw, b, r in params:
        y = conv3x3_same_nchw(out, w_oihw, b)       # Pallas conv, NCHW in/out
        out = pixel_shuffle_nchw(y, r)              # PixelShuffle(r)
    return out


# ---------------------------------------------------------------------------
# Pure-JAX reference (lax conv) for correctness check.
# ---------------------------------------------------------------------------
def upsample_block_ref(x_nchw, params):
    out = x_nchw
    for w_oihw, b, r in params:
        y = jax.lax.conv_general_dilated(
            out, w_oihw, window_strides=(1, 1), padding=((1, 1), (1, 1)),
            dimension_numbers=("NCHW", "OIHW", "NCHW"))
        y = y + b.reshape(1, -1, 1, 1)
        out = pixel_shuffle_nchw(y, r)
    return out


if __name__ == "__main__":
    key = jax.random.PRNGKey(0)
    k_x, k_p = jax.random.split(key)

    n_channels, scale = 4, 2
    x = jax.random.normal(k_x, (2, n_channels, 16, 16), jnp.float32)  # NCHW
    params = init_upsample_params(n_channels, scale, k_p)

    out = upsample_block_forward(x, params)
    out = jax.block_until_ready(out)

    ref = upsample_block_ref(x, params)
    assert out.shape == (2, n_channels, 16 * scale, 16 * scale), out.shape
    assert jnp.allclose(out, ref, atol=1e-4, rtol=1e-4), "mismatch vs reference"

    print("KERNEL_OK")
</pallas_src>

<mosaic_0001>
module attributes {stable_mosaic.version = 11 : i64} {
  func.func @_conv3x3_kernel(%arg0: i32, %arg1: memref<1x4x256xf32, #tpu.memory_space<vmem>>, %arg2: memref<16x36xf32, #tpu.memory_space<vmem>>, %arg3: memref<16x1xf32, #tpu.memory_space<vmem>>, %arg4: memref<36x256xf32, #tpu.memory_space<vmem>>, %arg5: memref<1x16x256xf32, #tpu.memory_space<vmem>>) attributes {dimension_semantics = [#tpu.dimension_semantics<parallel>], iteration_bounds = array<i64: 2>, scalar_prefetch = 0 : i64, scratch_operands = 0 : i64, tpu.core_type = #tpu.core_type<tc>, window_params = [{transform_indices = @transform_0, window_bounds = array<i64: 1, 4, 256>}, {pipeline_mode = #tpu.pipeline_mode<synchronous>, transform_indices = @transform_1, window_bounds = array<i64: 16, 36>}, {pipeline_mode = #tpu.pipeline_mode<synchronous>, transform_indices = @transform_2, window_bounds = array<i64: 16, 1>}, {pipeline_mode = #tpu.pipeline_mode<synchronous>, transform_indices = @transform_3, window_bounds = array<i64: 36, 256>}, {transform_indices = @transform_4, window_bounds = array<i64: 1, 16, 256>}]} {
    %c0 = arith.constant 0 : index
    %c0_0 = arith.constant 0 : index
    %c0_1 = arith.constant 0 : index
    %0 = vector.load %arg1[%c0, %c0_0, %c0_1] : memref<1x4x256xf32, #tpu.memory_space<vmem>>, vector<1x4x256xf32>
    %1 = vector.shape_cast %0 : vector<1x4x256xf32> to vector<4x256xf32>
    %2 = vector.extract_strided_slice %1 {offsets = [0, 239], sizes = [4, 17], strides = [1, 1]} : vector<4x256xf32> to vector<4x17xf32>
    %3 = vector.extract_strided_slice %1 {offsets = [0, 0], sizes = [4, 239], strides = [1, 1]} : vector<4x256xf32> to vector<4x239xf32>
    %4 = tpu.concatenate %2, %3 in 1 : vector<4x17xf32>, vector<4x239xf32> -> vector<4x256xf32>
    %5 = vector.extract_strided_slice %1 {offsets = [0, 240], sizes = [4, 16], strides = [1, 1]} : vector<4x256xf32> to vector<4x16xf32>
    %6 = vector.extract_strided_slice %1 {offsets = [0, 0], sizes = [4, 240], strides = [1, 1]} : vector<4x256xf32> to vector<4x240xf32>
    %7 = tpu.concatenate %5, %6 in 1 : vector<4x16xf32>, vector<4x240xf32> -> vector<4x256xf32>
    %8 = vector.extract_strided_slice %1 {offsets = [0, 241], sizes = [4, 15], strides = [1, 1]} : vector<4x256xf32> to vector<4x15xf32>
    %9 = vector.extract_strided_slice %1 {offsets = [0, 0], sizes = [4, 241], strides = [1, 1]} : vector<4x256xf32> to vector<4x241xf32>
    %10 = tpu.concatenate %8, %9 in 1 : vector<4x15xf32>, vector<4x241xf32> -> vector<4x256xf32>
    %11 = vector.extract_strided_slice %1 {offsets = [0, 255], sizes = [4, 1], strides = [1, 1]} : vector<4x256xf32> to vector<4x1xf32>
    %12 = vector.extract_strided_slice %1 {offsets = [0, 0], sizes = [4, 255], strides = [1, 1]} : vector<4x256xf32> to vector<4x255xf32>
    %13 = tpu.concatenate %11, %12 in 1 : vector<4x1xf32>, vector<4x255xf32> -> vector<4x256xf32>
    %14 = vector.extract_strided_slice %1 {offsets = [0, 1], sizes = [4, 255], strides = [1, 1]} : vector<4x256xf32> to vector<4x255xf32>
    %15 = vector.extract_strided_slice %1 {offsets = [0, 0], sizes = [4, 1], strides = [1, 1]} : vector<4x256xf32> to vector<4x1xf32>
    %16 = tpu.concatenate %14, %15 in 1 : vector<4x255xf32>, vector<4x1xf32> -> vector<4x256xf32>
    %17 = vector.extract_strided_slice %1 {offsets = [0, 15], sizes = [4, 241], strides = [1, 1]} : vector<4x256xf32> to vector<4x241xf32>
    %18 = vector.extract_strided_slice %1 {offsets = [0, 0], sizes = [4, 15], strides = [1, 1]} : vector<4x256xf32> to vector<4x15xf32>
    %19 = tpu.concatenate %17, %18 in 1 : vector<4x241xf32>, vector<4x15xf32> -> vector<4x256xf32>
    %20 = vector.extract_strided_slice %1 {offsets = [0, 16], sizes = [4, 240], strides = [1, 1]} : vector<4x256xf32> to vector<4x240xf32>
    %21 = vector.extract_strided_slice %1 {offsets = [0, 0], sizes = [4, 16], strides = [1, 1]} : vector<4x256xf32> to vector<4x16xf32>
    %22 = tpu.concatenate %20, %21 in 1 : vector<4x240xf32>, vector<4x16xf32> -> vector<4x256xf32>
    %23 = vector.extract_strided_slice %1 {offsets = [0, 17], sizes = [4, 239], strides = [1, 1]} : vector<4x256xf32> to vector<4x239xf32>
    %24 = vector.extract_strided_slice %1 {offsets = [0, 0], sizes = [4, 17], strides = [1, 1]} : vector<4x256xf32> to vector<4x17xf32>
    %25 = tpu.concatenate %23, %24 in 1 : vector<4x239xf32>, vector<4x17xf32> -> vector<4x256xf32>
    %26 = tpu.concatenate %4, %7, %10, %13, %1, %16, %19, %22, %25 in 0 : vector<4x256xf32>, vector<4x256xf32>, vector<4x256xf32>, vector<4x256xf32>, vector<4x256xf32>, vector<4x256xf32>, vector<4x256xf32>, vector<4x256xf32>, vector<4x256xf32> -> vector<36x256xf32>
    %c0_2 = arith.constant 0 : index
    %c0_3 = arith.constant 0 : index
    %27 = vector.load %arg4[%c0_2, %c0_3] : memref<36x256xf32, #tpu.memory_space<vmem>>, vector<36x256xf32>
    %28 = arith.mulf %26, %27 : vector<36x256xf32>
    %c0_4 = arith.constant 0 : index
    %c0_5 = arith.constant 0 : index
    %29 = vector.load %arg2[%c0_4, %c0_5] : memref<16x36xf32, #tpu.memory_space<vmem>>, vector<16x36xf32>
    %cst = arith.constant dense<0.000000e+00> : vector<16x256xf32>
    %30 = tpu.matmul %29, %28, %cst {dimension_numbers = #tpu.dot_dimension_numbers<[1], [0], [0], [1], [0, 0, 1, 1], [], []>} : vector<16x36xf32>, vector<36x256xf32>, vector<16x256xf32> -> vector<16x256xf32>
    %c0_6 = arith.constant 0 : index
    %c0_7 = arith.constant 0 : index
    %31 = vector.load %arg3[%c0_6, %c0_7] : memref<16x1xf32, #tpu.memory_space<vmem>>, vector<16x1xf32>
    %32 = vector.broadcast %31 : vector<16x1xf32> to vector<16x256xf32>
    %33 = arith.addf %30, %32 : vector<16x256xf32>
    %c0_8 = arith.constant 0 : index
    %c0_9 = arith.constant 0 : index
    %c0_10 = arith.constant 0 : index
    %34 = vector.load %arg5[%c0_8, %c0_9, %c0_10] : memref<1x16x256xf32, #tpu.memory_space<vmem>>, vector<1x16x256xf32>
    %35 = vector.shape_cast %34 : vector<1x16x256xf32> to vector<16x256xf32>
    %36 = vector.shape_cast %33 : vector<16x256xf32> to vector<1x16x256xf32>
    tpu.vector_store %arg5[%c0_8, %c0_9, %c0_10], %36 {strides = array<i32>} : memref<1x16x256xf32, #tpu.memory_space<vmem>>, vector<1x16x256xf32>,
    return
  }
  func.func @transform_0(%arg0: i32) -> (i32, i32, i32) {
    %c0_i32 = arith.constant 0 : i32
    %c0_i32_0 = arith.constant 0 : i32
    %c0_i32_1 = arith.constant 0 : i32
    return %arg0, %c0_i32, %c0_i32_0 : i32, i32, i32
  }
  func.func @transform_1(%arg0: i32) -> (i32, i32) {
    %c0_i32 = arith.constant 0 : i32
    %c0_i32_0 = arith.constant 0 : i32
    %c0_i32_1 = arith.constant 0 : i32
    return %c0_i32, %c0_i32_0 : i32, i32
  }
  func.func @transform_2(%arg0: i32) -> (i32, i32) {
    %c0_i32 = arith.constant 0 : i32
    %c0_i32_0 = arith.constant 0 : i32
    %c0_i32_1 = arith.constant 0 : i32
    return %c0_i32, %c0_i32_0 : i32, i32
  }
  func.func @transform_3(%arg0: i32) -> (i32, i32) {
    %c0_i32 = arith.constant 0 : i32
    %c0_i32_0 = arith.constant 0 : i32
    %c0_i32_1 = arith.constant 0 : i32
    return %c0_i32, %c0_i32_0 : i32, i32
  }
  func.func @transform_4(%arg0: i32) -> (i32, i32, i32) {
    %c0_i32 = arith.constant 0 : i32
    %c0_i32_0 = arith.constant 0 : i32
    %c0_i32_1 = arith.constant 0 : i32
    return %arg0, %c0_i32, %c0_i32_0 : i32, i32, i32
  }
}

</mosaic_0001>

<llo_original>
// kernel: tpu_custom_call.1
$region0: #{tpu_custom_call.1}
  #allocation0 [shape = 'u32[]', space=smem, size = 0x4, offset = 0x4, fixed_abs, tag = 'smem constant byte address 0x4 - core index']
  #allocation1 [shape = 'u32[72,128]{1,0:T(1,128)}', space=vmem, size = 0x9000, scoped, tag = 'internal scratch']
  %s0 = inlined_call_operand.vmem [shape: f32[2,4,256], index: 0, kind: input, shape index: {}]
  %s1 = inlined_call_operand.hbm [shape: f32[16,36], index: 1, kind: input, shape index: {}]
  %s2 = inlined_call_operand.vmem [shape: f32[16,1], index: 2, kind: input, shape index: {}]
  %s3 = inlined_call_operand.hbm [shape: f32[36,256], index: 3, kind: input, shape index: {}]
  %s4 = inlined_call_operand.hbm [shape: f32[2,16,256], index: 4, kind: output, shape index: {}]
  %s5 = sld [smem:[#allocation0]]
  $region57: #{tpu_custom_call.1} parent=0
    _
  %s7 = ssub.s32 1, %s5
  %s8 = scalar_select 0, %s7, %s5
  $region1: #{tpu_custom_call.1} parent=0
    #allocation2 [shape = 'u8[8192]{0}', space=vmem, size = 0x2000, scoped, tag = 'input window, operand 1, single buffered']
    #allocation3 [shape = 's32[2]{0}', space=sflag, size = 0x8, scoped, tag = 'scoped memory for tpu_custom_call.1']
    #allocation4 [shape = 's32[2]{0}', space=sflag, size = 0x8, scoped, tag = 'scoped memory for tpu_custom_call.1']
    #allocation5 [shape = 'u8[40960]{0}', space=vmem, size = 0xa000, scoped, tag = 'input window, operand 3, single buffered']
    #allocation6 [shape = 's32[1]{0}', space=sflag, size = 0x4, scoped, tag = 'scoped memory for tpu_custom_call.1']
    #allocation7 [shape = 'u8[32768]{0}', space=vmem, size = 0x8000, scoped, tag = 'output window, operand 0']
    %9 = vsyncpa [#allocation3], 0
    %10 = vsyncpa [#allocation6], 0
    %11 = vsyncpa [#allocation4], 0
    %s12 = scalar_lea.sflag [#allocation4], 1
    %13 = vsyncpa %s12, 0
    loop: start=0, step=1, limit=4
    $region2: #{tpu_custom_call.1} parent=1 // loop_pre_header
      _
    $region3: #{tpu_custom_call.1} parent=1 // loop_header
      %s15 = sphi 0, %s19
      %p16 = scmp.ge.s32.totalorder %s15, 4
      %s25 = sphi 0, %s27
      %s28 = sphi 0, %s25
      %s29 = sphi 0, %s28
      %s45 = sphi 0, %s29
      %s49 = sphi 0, %s49
      %s51 = sphi 0, %s49
      %s52 = sphi 0, %s51
      %s66 = sphi 0, %s52
      %s70 = sphi 0, %s70
      %s72 = sphi 0, %s70
      %s73 = sphi 0, %s72
      %s87 = sphi 0, %s73
      %s91 = sphi 0, %s91
      %s93 = sphi 0, %s91
      %s94 = sphi 0, %s93
      %s108 = sphi 0, %s94
      %s114 = sphi 0, %s116
      %s117 = sphi 0, %s114
      %s118 = sphi 0, %s117
      %s134 = sphi 0, %s118
    $region4: #{tpu_custom_call.1} parent=1 // loop_header_branch
      %18 = sbr.rel (%p16) target = $region8
    $region5: #{tpu_custom_call.1} parent=1 // loop_body
      %s20 = ssub.s32 %s15, 1
      %s21 = ssub.s32 %s15, 2
      %s22 = sadd.s32 %s15, 1
      %s23 = ssub.s32 %s15, %s22
      %p24 = scmp.eq.s32.totalorder %s23, 0
      %s26 = sadd.s32 %s25, 1
      %s27 = scalar_select %p24, %s25, %s26
      %p30 = pneg %p24
      %p31 = scmp.eq.s32.totalorder %s15, 1
      %p32 = por %p30, %p31
      %p33 = scmp.ne.s32.totalorder %s25, %s28
      %p34 = scmp.eq.s32.totalorder %s15, 0
      %p35 = por %p33, %p34
      %p36 = scmp.ne.s32.totalorder %s25, %s28
      %p37 = scmp.eq.s32.totalorder %s20, 1
      %p38 = por %p36, %p37
      %p39 = scmp.ne.s32.totalorder %s28, %s29
      %p40 = scmp.eq.s32.totalorder %s20, 0
      %p41 = por %p39, %p40
      %p42 = scmp.ne.s32.totalorder %s28, %s29
      %p43 = scmp.eq.s32.totalorder %s21, 1
      %p44 = por %p42, %p43
      %p46 = scmp.ne.s32.totalorder %s29, %s45
      %p47 = scmp.eq.s32.totalorder %s21, 0
      %p48 = por %p46, %p47
      %s50 = sadd.s32 %s49, 1
      %p53 = scmp.eq.s32.totalorder %s15, 1
      %p54 = scmp.ne.s32.totalorder %s49, %s51
      %p55 = scmp.eq.s32.totalorder %s15, 0
      %p56 = por %p54, %p55
      %p57 = scmp.ne.s32.totalorder %s49, %s51
      %p58 = scmp.eq.s32.totalorder %s20, 1
      %p59 = por %p57, %p58
      %p60 = scmp.ne.s32.totalorder %s51, %s52
      %p61 = scmp.eq.s32.totalorder %s20, 0
      %p62 = por %p60, %p61
      %p63 = scmp.ne.s32.totalorder %s51, %s52
      %p64 = scmp.eq.s32.totalorder %s21, 1
      %p65 = por %p63, %p64
      %p67 = scmp.ne.s32.totalorder %s52, %s66
      %p68 = scmp.eq.s32.totalorder %s21, 0
      %p69 = por %p67, %p68
      %s71 = sadd.s32 %s70, 1
      %p74 = scmp.eq.s32.totalorder %s15, 1
      %p75 = scmp.ne.s32.totalorder %s70, %s72
      %p76 = scmp.eq.s32.totalorder %s15, 0
      %p77 = por %p75, %p76
      %p78 = scmp.ne.s32.totalorder %s70, %s72
      %p79 = scmp.eq.s32.totalorder %s20, 1
      %p80 = por %p78, %p79
      %p81 = scmp.ne.s32.totalorder %s72, %s73
      %p82 = scmp.eq.s32.totalorder %s20, 0
      %p83 = por %p81, %p82
      %p84 = scmp.ne.s32.totalorder %s72, %s73
      %p85 = scmp.eq.s32.totalorder %s21, 1
      %p86 = por %p84, %p85
      %p88 = scmp.ne.s32.totalorder %s73, %s87
      %p89 = scmp.eq.s32.totalorder %s21, 0
      %p90 = por %p88, %p89
      %s92 = sadd.s32 %s91, 1
      %p95 = scmp.eq.s32.totalorder %s15, 1
      %p96 = scmp.ne.s32.totalorder %s91, %s93
      %p97 = scmp.eq.s32.totalorder %s15, 0
      %p98 = por %p96, %p97
      %p99 = scmp.ne.s32.totalorder %s91, %s93
      %p100 = scmp.eq.s32.totalorder %s20, 1
      %p101 = por %p99, %p100
      %p102 = scmp.ne.s32.totalorder %s93, %s94
      %p103 = scmp.eq.s32.totalorder %s20, 0
      %p104 = por %p102, %p103
      %p105 = scmp.ne.s32.totalorder %s93, %s94
      %p106 = scmp.eq.s32.totalorder %s21, 1
      %p107 = por %p105, %p106
      %p109 = scmp.ne.s32.totalorder %s94, %s108
      %p110 = scmp.eq.s32.totalorder %s21, 0
      %p111 = por %p109, %p110
      %s112 = ssub.s32 %s15, %s22
      %p113 = scmp.eq.s32.totalorder %s112, 0
      %s115 = sadd.s32 %s114, 1
      %s116 = scalar_select %p113, %s114, %s115
      %p119 = pneg %p113
      %p120 = scmp.eq.s32.totalorder %s15, 1
      %p121 = por %p119, %p120
      %p122 = scmp.ne.s32.totalorder %s114, %s117
      %p123 = scmp.eq.s32.totalorder %s15, 0
      %p124 = por %p122, %p123
      %p125 = scmp.ne.s32.totalorder %s114, %s117
      %p126 = scmp.eq.s32.totalorder %s20, 1
      %p127 = por %p125, %p126
      %p128 = scmp.ne.s32.totalorder %s117, %s118
      %p129 = scmp.eq.s32.totalorder %s20, 0
      %p130 = por %p128, %p129
      %p131 = scmp.ne.s32.totalorder %s117, %s118
      %p132 = scmp.eq.s32.totalorder %s21, 1
      %p133 = por %p131, %p132
      %p135 = scmp.ne.s32.totalorder %s118, %s134
      %p136 = scmp.eq.s32.totalorder %s21, 0
      %p137 = por %p135, %p136
      %p138 = scmp.le.s32.totalorder 1, %s15
      %p139 = scmp.lt.s32.totalorder %s15, 3
      %p140 = pnand %p138, %p139
      %p141 = pneg %p140
      // Predicated region
      $region9: #{tpu_custom_call.1} parent=5 // pred_check
        _
      $region10: #{tpu_custom_call.1} parent=5 // pred_check_branch
        %143 = sbr.rel (%p140) target = $region12
      $region11: #{tpu_custom_call.1} parent=5 // pred_region
        %s144 = ssub.s32 %s15, 1
        // Predicated region
        $region13: #{tpu_custom_call.1} parent=11 // pred_check
          %p145 = pneg %p62
        $region14: #{tpu_custom_call.1} parent=11 // pred_check_branch
          %147 = sbr.rel (%p145) target = $region16
        $region15: #{tpu_custom_call.1} parent=11 // pred_region
          %149 = vsyncadd [#allocation3], 0
          %s150 = sshll.u32 %s1, 4
          %s151 = int_to_ptr.hbm [resolvable:$true] %s150
          %s152 = sshll.u32 [#allocation2], 4
          %s153 = int_to_ptr.vmem [resolvable:$true] %s152
          %158 = dma.hbm_to_vmem [thread:$0]  %s151, 256, %s153, [#allocation3], 128, 128, 8
        $region16: #{tpu_custom_call.1} parent=11 // pred_fallthru
          _
        // Predicated region
        $region17: #{tpu_custom_call.1} parent=11 // pred_check
          %p159 = pneg %p83
        $region18: #{tpu_custom_call.1} parent=11 // pred_check_branch
          %161 = sbr.rel (%p159) target = $region20
        $region19: #{tpu_custom_call.1} parent=11 // pred_region
          _
        $region20: #{tpu_custom_call.1} parent=11 // pred_fallthru
          _
        // Predicated region
        $region21: #{tpu_custom_call.1} parent=11 // pred_check
          %p162 = pneg %p104
        $region22: #{tpu_custom_call.1} parent=11 // pred_check_branch
          %164 = sbr.rel (%p162) target = $region24
        $region23: #{tpu_custom_call.1} parent=11 // pred_region
          %166 = vsyncadd [#allocation6], 0
          %s167 = sshll.u32 %s3, 4
          %s168 = int_to_ptr.hbm [resolvable:$true] %s167
          %s169 = sshll.u32 [#allocation5], 4
          %s170 = int_to_ptr.vmem [resolvable:$true] %s169
          %175 = dma.hbm_to_vmem [thread:$0]  %s168, 1280, %s170, [#allocation6], 256, 256, 16
        $region24: #{tpu_custom_call.1} parent=11 // pred_fallthru
          _
      $region12: #{tpu_custom_call.1} parent=5 // pred_fallthru
        _
      %p176 = scmp.lt.s32.totalorder %s15, 2
      // Predicated region
      $region25: #{tpu_custom_call.1} parent=5 // pred_check
        %p177 = pneg %p176
      $region26: #{tpu_custom_call.1} parent=5 // pred_check_branch
        %179 = sbr.rel (%p177) target = $region28
      $region27: #{tpu_custom_call.1} parent=5 // pred_region
        // Predicated region
        $region29: #{tpu_custom_call.1} parent=27 // pred_check
          %p180 = pneg %p35
        $region30: #{tpu_custom_call.1} parent=27 // pred_check_branch
          %182 = sbr.rel (%p180) target = $region32
        $region31: #{tpu_custom_call.1} parent=27 // pred_region
          %p183 = scmp.lt.s32.totalorder %s15, 1
          %s184 = scalar_select %p183, %s15, 1
          %s185 = smul.addr %s184, 2
          %s186 = smul.addr %s185, 4
          %s187 = scalar_lea.vmem %s0, %s186
        $region32: #{tpu_custom_call.1} parent=27 // pred_fallthru
          _
      $region28: #{tpu_custom_call.1} parent=5 // pred_fallthru
        _
      %p188 = scmp.le.s32.totalorder 1, %s15
      %p189 = scmp.lt.s32.totalorder %s15, 3
      %p190 = pnand %p188, %p189
      %p191 = pneg %p190
      // Predicated region
      $region33: #{tpu_custom_call.1} parent=5 // pred_check
        _
      $region34: #{tpu_custom_call.1} parent=5 // pred_check_branch
        %193 = sbr.rel (%p190) target = $region36
      $region35: #{tpu_custom_call.1} parent=5 // pred_region
        %s194 = ssub.s32 %s15, 1
        // Predicated region
        $region37: #{tpu_custom_call.1} parent=35 // pred_check
          %p195 = pneg %p62
        $region38: #{tpu_custom_call.1} parent=35 // pred_check_branch
          %197 = sbr.rel (%p195) target = $region40
        $region39: #{tpu_custom_call.1} parent=35 // pred_region
          %199 = dma.done [#allocation3], 256
        $region40: #{tpu_custom_call.1} parent=35 // pred_fallthru
          _
        // Predicated region
        $region41: #{tpu_custom_call.1} parent=35 // pred_check
          %p200 = pneg %p104
        $region42: #{tpu_custom_call.1} parent=35 // pred_check_branch
          %202 = sbr.rel (%p200) target = $region44
        $region43: #{tpu_custom_call.1} parent=35 // pred_region
          %204 = dma.done [#allocation6], 1280
        $region44: #{tpu_custom_call.1} parent=35 // pred_fallthru
          _
        %p205 = scmp.lt.s32.totalorder %s20, 1
        %s206 = scalar_select %p205, %s20, 1
        %s207 = smul.addr %s206, 2
        %s208 = smul.addr %s207, 4
        %s209 = scalar_lea.vmem %s0, %s208
        %p210 = pneg %p41
        %p211 = pneg %p38
        %p212 = pneg %p62
        %p213 = pneg %p59
        %p214 = pneg %p83
        %p215 = pneg %p80
        %p216 = pneg %p104
        %p217 = pneg %p101
        %p218 = pneg %p130
        %p219 = pneg %p127
        %s220 = sand.u32 %s117, 1
        %s221 = scalar_lea.sflag [#allocation4], %s220
        %s222 = sand.u32 %s117, 1
        %s223 = smul.addr %s222, 32
        %s224 = scalar_lea.vmem [#allocation7], %s223
        %p225 = scmp.lt.s32.totalorder %s20, 1
        %s226 = scalar_select %p225, %s20, 1
        %s227 = smul.addr %s226, 2
        %s228 = smul.addr %s227, 4
        %s229 = scalar_lea.vmem %s0, %s228
        %v230 = vld [vmem:[%s229] sm:$0xff]
        %232 = vst [vmem:[#allocation1] ss:$2 sm:$0xff] %v230
        %v233 = vld.sshfl [vmem:[#allocation1 + $0x8] sm:$0xff pattern:$0x75316420]
        %234 = vrot.lane.b32.xlu0 %v233, 17
        %v235 = vpop.permute.xlu0 %234
        %237 = vst [vmem:[#allocation1] ss:$2 sm:$0xff] %v230
        %v238 = vld.sshfl [vmem:[#allocation1] sm:$0xff pattern:$0x75316420]
        %v239 = vld.sshfl [vmem:[#allocation1 + $0x8] sm:$0xff pattern:$0x75316420]
        %240 = vrot.lane.b32.xlu0 %v238, 17
        %v241 = vpop.permute.xlu0 %240
        %242 = vrot.lane.b32.xlu0 %v239, 17
        %v243 = vpop.permute.xlu0 %242
        %vm244 = vcmask 138240
        %v245 = vsel %vm244, %v241, %v243
        %v248 = vsel %vm244, %v235, %v241
        %249 = vst [vmem:[#allocation1] ss:$2 sm:$0xff] %v230
        %v250 = vld.sshfl [vmem:[#allocation1 + $0x8] sm:$0xff pattern:$0x75316420]
        %251 = vrot.lane.b32.xlu0 %v250, 16
        %v252 = vpop.permute.xlu0 %251
        %254 = vst [vmem:[#allocation1] ss:$2 sm:$0xff] %v230
        %v255 = vld.sshfl [vmem:[#allocation1] sm:$0xff pattern:$0x75316420]
        %v256 = vld.sshfl [vmem:[#allocation1 + $0x8] sm:$0xff pattern:$0x75316420]
        %257 = vrot.lane.b32.xlu0 %v255, 16
        %v258 = vpop.permute.xlu0 %257
        %259 = vrot.lane.b32.xlu0 %v256, 16
        %v260 = vpop.permute.xlu0 %259
        %vm261 = vcmask 130048
        %v262 = vsel %vm261, %v258, %v260
        %v264 = vsel %vm261, %v252, %v258
        %265 = vst [vmem:[#allocation1] ss:$2 sm:$0xff] %v230
        %v266 = vld.sshfl [vmem:[#allocation1 + $0x8] sm:$0xff pattern:$0x75316420]
        %267 = vrot.lane.b32.xlu0 %v266, 15
        %v268 = vpop.permute.xlu0 %267
        %270 = vst [vmem:[#allocation1] ss:$2 sm:$0xff] %v230
        %v271 = vld.sshfl [vmem:[#allocation1] sm:$0xff pattern:$0x75316420]
        %v272 = vld.sshfl [vmem:[#allocation1 + $0x8] sm:$0xff pattern:$0x75316420]
        %273 = vrot.lane.b32.xlu0 %v271, 15
        %v274 = vpop.permute.xlu0 %273
        %275 = vrot.lane.b32.xlu0 %v272, 15
        %v276 = vpop.permute.xlu0 %275
        %vm277 = vcmask 121856
        %v278 = vsel %vm277, %v274, %v276
        %v281 = vsel %vm277, %v268, %v274
        %282 = vst [vmem:[#allocation1] ss:$2 sm:$0xff] %v230
        %v283 = vld.sshfl [vmem:[#allocation1 + $0x8] sm:$0xff pattern:$0x75316420]
        %284 = vrot.lane.b32.xlu0 %v283, 1
        %v285 = vpop.permute.xlu0 %284
        %287 = vst [vmem:[#allocation1] ss:$2 sm:$0xff] %v230
        %v288 = vld.sshfl [vmem:[#allocation1] sm:$0xff pattern:$0x75316420]
        %v289 = vld.sshfl [vmem:[#allocation1 + $0x8] sm:$0xff pattern:$0x75316420]
        %290 = vrot.lane.b32.xlu0 %v288, 1
        %v291 = vpop.permute.xlu0 %290
        %292 = vrot.lane.b32.xlu0 %v289, 1
        %v293 = vpop.permute.xlu0 %292
        %vm294 = vcmask 7168
        %v295 = vsel %vm294, %v291, %v293
        %v297 = vsel %vm294, %v285, %v291
        %298 = vst [vmem:[#allocation1] ss:$2 sm:$0xff] %v230
        %v299 = vld.sshfl [vmem:[#allocation1] sm:$0xff pattern:$0x75316420]
        %v300 = vld.sshfl [vmem:[#allocation1 + $0x8] sm:$0xff pattern:$0x75316420]
        %301 = vrot.lane.b32.xlu0 %v299, 127
        %v302 = vpop.permute.xlu0 %301
        %303 = vrot.lane.b32.xlu0 %v300, 127
        %v304 = vpop.permute.xlu0 %303
        %vm305 = vcmask 1039360
        %v306 = vsel %vm305, %v302, %v304
        %308 = vst [vmem:[#allocation1] ss:$2 sm:$0xff] %v230
        %v309 = vld.sshfl [vmem:[#allocation1] sm:$0xff pattern:$0x75316420]
        %310 = vrot.lane.b32.xlu0 %v309, 127
        %v311 = vpop.permute.xlu0 %310
        %v313 = vsel %vm305, %v304, %v311
        %314 = vst [vmem:[#allocation1] ss:$2 sm:$0xff] %v230
        %v315 = vld.sshfl [vmem:[#allocation1] sm:$0xff pattern:$0x75316420]
        %v316 = vld.sshfl [vmem:[#allocation1 + $0x8] sm:$0xff pattern:$0x75316420]
        %317 = vrot.lane.b32.xlu0 %v315, 113
        %v318 = vpop.permute.xlu0 %317
        %319 = vrot.lane.b32.xlu0 %v316, 113
        %v320 = vpop.permute.xlu0 %319
        %vm321 = vcmask 924672
        %v322 = vsel %vm321, %v318, %v320
        %325 = vst [vmem:[#allocation1] ss:$2 sm:$0xff] %v230
        %v326 = vld.sshfl [vmem:[#allocation1] sm:$0xff pattern:$0x75316420]
        %327 = vrot.lane.b32.xlu0 %v326, 113
        %v328 = vpop.permute.xlu0 %327
        %v330 = vsel %vm321, %v320, %v328
        %331 = vst [vmem:[#allocation1] ss:$2 sm:$0xff] %v230
        %v332 = vld.sshfl [vmem:[#allocation1] sm:$0xff pattern:$0x75316420]
        %v333 = vld.sshfl [vmem:[#allocation1 + $0x8] sm:$0xff pattern:$0x75316420]
        %334 = vrot.lane.b32.xlu0 %v332, 112
        %v335 = vpop.permute.xlu0 %334
        %336 = vrot.lane.b32.xlu0 %v333, 112
        %v337 = vpop.permute.xlu0 %336
        %vm338 = vcmask 916480
        %v339 = vsel %vm338, %v335, %v337
        %341 = vst [vmem:[#allocation1] ss:$2 sm:$0xff] %v230
        %v342 = vld.sshfl [vmem:[#allocation1] sm:$0xff pattern:$0x75316420]
        %343 = vrot.lane.b32.xlu0 %v342, 112
        %v344 = vpop.permute.xlu0 %343
        %v346 = vsel %vm338, %v337, %v344
        %347 = vst [vmem:[#allocation1] ss:$2 sm:$0xff] %v230
        %v348 = vld.sshfl [vmem:[#allocation1] sm:$0xff pattern:$0x75316420]
        %v349 = vld.sshfl [vmem:[#allocation1 + $0x8] sm:$0xff pattern:$0x75316420]
        %350 = vrot.lane.b32.xlu0 %v348, 111
        %v351 = vpop.permute.xlu0 %350
        %352 = vrot.lane.b32.xlu0 %v349, 111
        %v353 = vpop.permute.xlu0 %352
        %vm354 = vcmask 908288
        %v355 = vsel %vm354, %v351, %v353
        %358 = vst [vmem:[#allocation1] ss:$2 sm:$0xff] %v230
        %v359 = vld.sshfl [vmem:[#allocation1] sm:$0xff pattern:$0x75316420]
        %360 = vrot.lane.b32.xlu0 %v359, 111
        %v361 = vpop.permute.xlu0 %360
        %v363 = vsel %vm354, %v353, %v361
        %v365 = vrot.slane %v264, 4
        %v366 = vrot.slane %v262, 4
        %v370 = vrot.slane %v297, 4
        %v371 = vrot.slane %v295, 4
        %374 = vst [vmem:[#allocation1] ss:$2 sm:$0xff] %v230
        %v375 = vld.sshfl [vmem:[#allocation1] sm:$0xff pattern:$0x75316420]
        %v376 = vld.sshfl [vmem:[#allocation1 + $0x8] sm:$0xff pattern:$0x75316420]
        %v380 = vrot.slane %v306, 4
        %v381 = vrot.slane %v313, 4
        %v385 = vrot.slane %v339, 4
        %v386 = vrot.slane %v346, 4
        %vm389 = vcmask 1043456
        %v390 = vsel %vm389, %v248, %v365
        %v391 = vsel %vm389, %v245, %v366
        %v392 = vsel %vm389, %v281, %v370
        %v393 = vsel %vm389, %v278, %v371
        %v394 = vsel %vm389, %v375, %v380
        %v395 = vsel %vm389, %v376, %v381
        %v396 = vsel %vm389, %v322, %v385
        %v397 = vsel %vm389, %v330, %v386
        %v398 = vld [vmem:[#allocation5] sm:$0xff]
        %v399 = vld [vmem:[#allocation5 + $0x8] sm:$0xff]
        %v400 = vld [vmem:[#allocation5 + $0x10] sm:$0xff]
        %v401 = vld [vmem:[#allocation5 + $0x18] sm:$0xff]
        %v402 = vld [vmem:[#allocation5 + $0x20] sm:$0xff]
        %v403 = vld [vmem:[#allocation5 + $0x28] sm:$0xff]
        %v404 = vld [vmem:[#allocation5 + $0x30] sm:$0xff]
        %v405 = vld [vmem:[#allocation5 + $0x38] sm:$0xff]
        %v406 = vld [vmem:[#allocation5 + $0x40] sm:$0xf]
        %v407 = vld [vmem:[#allocation5 + $0x48] sm:$0xf]
        %v408 = vmul.f32 %v390, %v398
        %v409 = vmul.f32 %v391, %v399
        %v410 = vmul.f32 %v392, %v400
        %v411 = vmul.f32 %v393, %v401
        %v412 = vmul.f32 %v394, %v402
        %v413 = vmul.f32 %v395, %v403
        %v414 = vmul.f32 %v396, %v404
        %v415 = vmul.f32 %v397, %v405
        %v416 = vmul.f32 %v355, %v406
        %v417 = vmul.f32 %v363, %v407
        %v418 = vld [vmem:[#allocation2] sm:$0xff]
        %v419 = vld [vmem:[#allocation2 + $0x8] sm:$0xff]
        %v420 = vld [vmem:[%s2] sm:$0xff]
        %v421 = vld [vmem:[%s2 + $0x8] sm:$0xff]
        %423 = vset.pattern.permute.xlu0 0
        %424 = vperm.xlu0 %423, %v420
        %v425 = vpop.permute.xlu0 %424
        %428 = vset.pattern.permute.xlu0 0
        %429 = vperm.xlu0 %428, %v421
        %v430 = vpop.permute.xlu0 %429
        %vm432 = vcmask 293888
        %v434 = vsel %vm432, %v418, 0
        %v437 = vsel %vm432, %v419, 0
        %v440 = vsel %vm389, %v416, 0
        %v443 = vsel %vm389, %v417, 0
        %445 = vmatpush.msra.mxu0 0.0
        %446 = vmatpush.msra.mxu0 0.0
        %447 = vmatpush.msra.mxu0 0.0
        %448 = vmatpush.msra.mxu0 0.0
        %449 = vmatpush.msra.mxu0 0.0
        %450 = vmatpush.msra.mxu0 0.0
        %451 = vmatpush.msra.mxu0 0.0
        %452 = vmatpush.msra.mxu0 0.0
        %453 = vmatpush.msra.mxu0 0.0
        %454 = vmatpush.msra.mxu0 0.0
        %455 = vmatpush.msra.mxu0 0.0
        %456 = vmatpush.msra.mxu0 %v440
        %457 = vmatpush.msra.mxu0 %v414
        %458 = vmatpush.msra.mxu0 %v412
        %459 = vmatpush.msra.mxu0 %v410
        %460 = vmatpush.msra.mxu0 %v408
        %461 = vmatmul.f32.gmra.mxu0 %v434
        %v462 = vpop.f32.mrf.mxu0
        %v463 = vadd.f32 %v425, %v462
        %464 = vmatmul.f32.gmra.mxu0 %v437
        %v465 = vpop.f32.mrf.mxu0
        %v466 = vadd.f32 %v430, %v465
        %467 = vdwg.mxu0
        %468 = vmatpush.msra.mxu0 0.0
        %469 = vmatpush.msra.mxu0 0.0
        %470 = vmatpush.msra.mxu0 0.0
        %471 = vmatpush.msra.mxu0 0.0
        %472 = vmatpush.msra.mxu0 0.0
        %473 = vmatpush.msra.mxu0 0.0
        %474 = vmatpush.msra.mxu0 0.0
        %475 = vmatpush.msra.mxu0 0.0
        %476 = vmatpush.msra.mxu0 0.0
        %477 = vmatpush.msra.mxu0 0.0
        %478 = vmatpush.msra.mxu0 0.0
        %479 = vmatpush.msra.mxu0 %v443
        %480 = vmatpush.msra.mxu0 %v415
        %481 = vmatpush.msra.mxu0 %v413
        %482 = vmatpush.msra.mxu0 %v411
        %483 = vmatpush.msra.mxu0 %v409
        %484 = vmatmul.f32.gmra.mxu0 %v434
        %v485 = vpop.f32.mrf.mxu0
        %v486 = vadd.f32 %v425, %v485
        %487 = vmatmul.f32.gmra.mxu0 %v437
        %v488 = vpop.f32.mrf.mxu0
        %v489 = vadd.f32 %v430, %v488
        %490 = vdwg.mxu0
        %491 = vst [vmem:[%s224] sm:$0xff] %v463
        %492 = vst [vmem:[%s224 + $0x8] sm:$0xff] %v486
        %493 = vst [vmem:[%s224 + $0x10] sm:$0xff] %v466
        %494 = vst [vmem:[%s224 + $0x18] sm:$0xff] %v489
        %s495 = sand.u32 %s117, 1
        %s496 = scalar_lea.sflag [#allocation4], %s495
        %s497 = sand.u32 %s117, 1
        %s498 = smul.addr %s497, 32
        %s499 = scalar_lea.vmem [#allocation7], %s498
        // Predicated region
        $region45: #{tpu_custom_call.1} parent=35 // pred_check
          %p500 = pneg %p127
        $region46: #{tpu_custom_call.1} parent=35 // pred_check_branch
          %502 = sbr.rel (%p500) target = $region48
        $region47: #{tpu_custom_call.1} parent=35 // pred_region
          %504 = vsyncadd %s496, 0
          %s505 = smul.addr %s20, 4
          %s506 = smul.addr %s505, 8
          %s507 = scalar_lea.hbm %s4, %s506
          %s508 = sshll.u32 %s499, 4
          %s509 = int_to_ptr.vmem [resolvable:$true] %s508
          %s510 = sshll.u32 %s507, 4
          %s511 = int_to_ptr.hbm [resolvable:$true] %s510
          %516 = dma.vmem_to_hbm [thread:$0]  %s509, 512, %s511, %s496, 256, 256, 16
        $region48: #{tpu_custom_call.1} parent=35 // pred_fallthru
          _
      $region36: #{tpu_custom_call.1} parent=5 // pred_fallthru
        _
      %p517 = scmp.le.s32.totalorder 2, %s15
      // Predicated region
      $region49: #{tpu_custom_call.1} parent=5 // pred_check
        %p518 = pneg %p517
      $region50: #{tpu_custom_call.1} parent=5 // pred_check_branch
        %520 = sbr.rel (%p518) target = $region52
      $region51: #{tpu_custom_call.1} parent=5 // pred_region
        %s521 = ssub.s32 %s15, 2
        // Predicated region
        $region53: #{tpu_custom_call.1} parent=51 // pred_check
          %p522 = pneg %p133
        $region54: #{tpu_custom_call.1} parent=51 // pred_check_branch
          %524 = sbr.rel (%p522) target = $region56
        $region55: #{tpu_custom_call.1} parent=51 // pred_region
          %s525 = sand.u32 %s118, 1
          %s526 = scalar_lea.sflag [#allocation4], %s525
          %s527 = sand.u32 %s118, 1
          %s528 = smul.addr %s527, 32
          %s529 = scalar_lea.vmem [#allocation7], %s528
          %531 = dma.done %s526, 512
        $region56: #{tpu_custom_call.1} parent=51 // pred_fallthru
          _
      $region52: #{tpu_custom_call.1} parent=5 // pred_fallthru
        _
    $region6: #{tpu_custom_call.1} parent=1 // loop_footer
      %s19 = sadd.s32 1, %s15
    $region7: #{tpu_custom_call.1} parent=1 // loop_footer_branch
      %14 = sbr.rel target = $region3
    $region8: #{tpu_custom_call.1} parent=1 // loop_exit
      _
    %532 = vsyncpa [#allocation3], 1
    %s533 = scalar_lea.sflag [#allocation3], 1
    %534 = vsyncpa %s533, 1
    %535 = vsyncpa [#allocation6], 1
    %536 = vsyncpa [#allocation4], 1
    %s537 = scalar_lea.sflag [#allocation4], 1
    %538 = vsyncpa %s537, 1

</llo_original>
